<compile_context>
chip_gen: v5e
topology: v5e:2x2
jax: 0.10.0
libtpu: 0.0.40
codegen_flags: <defaults>
</compile_context>

<pallas_src>
import functools

import jax
import jax.numpy as jnp
from jax.experimental import pallas as pl
from jax.experimental.pallas import tpu as pltpu


# --------------------------- per-generation config ---------------------------

def _vmem_capacity_bytes():
    try:
        info = pltpu.get_tpu_info()
        cap = getattr(info, "vmem_capacity_bytes", None)
        if cap:
            return int(cap)
    except Exception:
        pass
    return 64 * 1024 * 1024  # conservative (v7x-sized) fallback


_VMEM_CAP = _vmem_capacity_bytes()
_SMALL_VMEM = _VMEM_CAP < 100 * 1024 * 1024          # v7x-class (64 MiB physical)
VMEM_LIMIT_BYTES = (44 if _SMALL_VMEM else 96) * 1024 * 1024
TQ_TARGET = 256 if _SMALL_VMEM else 512              # K/V re-read factor = S / tq
TK_TARGET = 256                                      # 256-deep contraction for the PV matmul


def _sublane_align(dtype):
    # bf16 packs 2 rows per sublane -> tiles should be multiples of 16, f32 of 8.
    return 16 if jnp.dtype(dtype).itemsize == 2 else 8


def _tile(n, target, align=8):
    """Largest divisor of n that is <= target and a multiple of `align`.

    Falls back to the full dimension (always a legal block shape)."""
    if n <= target:
        return n
    for t in range(min(n, target), 0, -1):
        if n % t == 0 and t % align == 0:
            return t
    return n


# ----------------------------- linear kernel --------------------------------

def linear_kernel(x_ref, w_ref, b_ref, o_ref):
    # o = x @ w + b   (MXU matmul, f32 accumulate)
    acc = jnp.dot(x_ref[...], w_ref[...], preferred_element_type=jnp.float32)
    o_ref[...] = (acc + b_ref[...].astype(jnp.float32)).astype(o_ref.dtype)


def linear(x2d, w, b, *, tm_target=512):
    """x2d: (N, Cin) @ w: (Cin, Cout) + b -> (N, Cout).

    The weight column tile is made as wide as the VMEM budget allows — for SAM
    dims that is the whole weight, so it stays resident and x is read exactly
    once (minimum x + W + out HBM traffic); tm=512 amortizes per-step overhead."""
    N, Cin = x2d.shape
    Cout = w.shape[1]
    itemsize = jnp.dtype(w.dtype).itemsize
    weight_budget = VMEM_LIMIT_BYTES // 3
    tn_target = max(128, weight_budget // max(1, Cin * itemsize))
    tn = _tile(Cout, tn_target, align=128)               # lane-dense output columns
    tm = _tile(N, tm_target, align=_sublane_align(x2d.dtype))
    grid = (Cout // tn, N // tm)                          # rows innermost -> weight resident
    return pl.pallas_call(
        linear_kernel,
        out_shape=jax.ShapeDtypeStruct((N, Cout), x2d.dtype),
        grid=grid,
        in_specs=[
            pl.BlockSpec((tm, Cin), lambda j, i: (i, 0)),   # activations stream over rows
            pl.BlockSpec((Cin, tn), lambda j, i: (0, j)),   # weight: constant across row sweep
            pl.BlockSpec((1, tn), lambda j, i: (0, j)),     # bias
        ],
        out_specs=pl.BlockSpec((tm, tn), lambda j, i: (i, j)),
        compiler_params=pltpu.CompilerParams(
            dimension_semantics=("parallel", "parallel"),
            vmem_limit_bytes=VMEM_LIMIT_BYTES,
        ),
    )(x2d, w, b.reshape(1, Cout))


# ------------------------ flash attention kernel -----------------------------

def flash_attn_kernel(q_ref, k_ref, v_ref, o_ref, m_ref, l_ref, acc_ref,
                      *, num_heads, head_dim):
    # q_ref: (nH, tq, hd), k_ref/v_ref: (nH, tk, hd), o_ref: (tq, nH*hd)
    kv_idx = pl.program_id(2)

    @pl.when(kv_idx == 0)
    def _init():
        m_ref[...] = jnp.full(m_ref.shape, -jnp.inf, jnp.float32)
        l_ref[...] = jnp.zeros(l_ref.shape, jnp.float32)
        acc_ref[...] = jnp.zeros(acc_ref.shape, jnp.float32)

    # Softmax scale is folded into W_q/b_q at init -> no per-step q*scale multiply.
    q = q_ref[...]
    k = k_ref[...]
    v = v_ref[...]

    # Scores: contract head_dim of q and k directly (no explicit k.T / XLU transpose).
    s = jnp.einsum("hqd,hkd->hqk", q, k,
                   preferred_element_type=jnp.float32)          # (nH, tq, tk) f32

    m_prev = m_ref[...]                                          # (nH, tq, 1)
    m_new = jnp.maximum(m_prev, jnp.max(s, axis=-1, keepdims=True))
    alpha = jnp.exp(m_prev - m_new)                              # rescale factor
    # TODO(synk): on v5e (EUP is f32-only / slower) fold log2(e) into the weight
    # scale and switch to jnp.exp2 to drop one multiply per score element.
    p = jnp.exp(s - m_new)                                       # unnormalized probs (f32)

    l_ref[...] = alpha * l_ref[...] + jnp.sum(p, axis=-1, keepdims=True)
    acc_ref[...] = alpha * acc_ref[...] + jnp.einsum(
        "hqk,hkd->hqd", p.astype(v.dtype), v,
        preferred_element_type=jnp.float32)                      # (nH, tq, hd)
    m_ref[...] = m_new

    @pl.when(kv_idx == pl.num_programs(2) - 1)
    def _finalize():
        # Deferred softmax normalization: approx reciprocal (EUP slot) + one Newton
        # step (VPU-cheap, ~f32-exact) instead of a full divide on the epilogue path.
        l = l_ref[...]
        inv = pl.reciprocal(l, approx=True)                      # (nH, tq, 1)
        inv = inv * (2.0 - l * inv)
        # Merged-head output block. The per-head writes below are VMEM-local masked
        # stores issued once per q tile; the HBM writeback of the full (tq, nH*hd)
        # block is a single lane-dense DMA performed by the pipeline.
        for h in range(num_heads):   # static unroll
            lo = h * head_dim
            o_ref[:, lo:lo + head_dim] = (acc_ref[h] * inv[h]).astype(o_ref.dtype)


def flash_attention(q, k, v, *, tq_target=None, tk_target=None):
    """q, k, v: (B, num_heads, S, head_dim) -> (B, S, num_heads*head_dim)."""
    B, nH, S, hd = q.shape
    C = nH * hd
    if tq_target is None:
        tq_target = TQ_TARGET
    if tk_target is None:
        tk_target = TK_TARGET
    align = _sublane_align(q.dtype)
    tq = _tile(S, tq_target, align=align)
    tk = _tile(S, tk_target, align=align)
    grid = (B, S // tq, S // tk)   # KV axis last ("arbitrary"); q tile resident across it
    kernel = functools.partial(flash_attn_kernel, num_heads=nH, head_dim=hd)
    # TODO(synk): if xprof still shows exposed K/V DMA at these tile sizes, add
    # pipeline_mode=pl.Buffered(3) on the k/v specs (costs one extra (nH,tk,hd) buffer).
    return pl.pallas_call(
        kernel,
        out_shape=jax.ShapeDtypeStruct((B, S, C), q.dtype),
        grid=grid,
        in_specs=[
            pl.BlockSpec((None, nH, tq, hd), lambda b, qi, ki: (b, 0, qi, 0)),
            pl.BlockSpec((None, nH, tk, hd), lambda b, qi, ki: (b, 0, ki, 0)),
            pl.BlockSpec((None, nH, tk, hd), lambda b, qi, ki: (b, 0, ki, 0)),
        ],
        out_specs=pl.BlockSpec((None, tq, C), lambda b, qi, ki: (b, qi, 0)),
        scratch_shapes=[
            pltpu.VMEM((nH, tq, 1), jnp.float32),   # running max m
            pltpu.VMEM((nH, tq, 1), jnp.float32),   # running denom l
            pltpu.VMEM((nH, tq, hd), jnp.float32),  # output accumulator
        ],
        compiler_params=pltpu.CompilerParams(
            dimension_semantics=("parallel", "parallel", "arbitrary"),
            vmem_limit_bytes=VMEM_LIMIT_BYTES,
        ),
    )(q, k, v)


# ----------------------------- Module wrapper -------------------------------

class AttentionPallas:
    """JAX/Pallas port of SAMEncoder.Attention (qkv_bias=True, use_rel_pos=False)."""

    def __init__(self, dim, num_heads=8, key=None, dtype=jnp.float32):
        assert dim % num_heads == 0
        self.dim = dim
        self.num_heads = num_heads
        self.head_dim = dim // num_heads
        self.scale = self.head_dim ** (-0.5)
        key = key if key is not None else jax.random.PRNGKey(0)
        k1, k2, k3, k4 = jax.random.split(key, 4)
        # Parameters stored as (in, out) so forward is x @ W (== torch x @ W.T).
        w_qkv = jax.random.normal(k1, (dim, 3 * dim), jnp.float32) * 0.05
        b_qkv = jax.random.normal(k2, (3 * dim,), jnp.float32) * 0.05
        w_proj = jax.random.normal(k3, (dim, dim), jnp.float32) * 0.05
        b_proj = jax.random.normal(k4, (dim,), jnp.float32) * 0.05
        # Unfolded f32 copies (PyTorch-equivalent parameters, used by the reference).
        self.w_qkv_raw, self.b_qkv_raw = w_qkv, b_qkv
        self.w_proj_raw, self.b_proj_raw = w_proj, b_proj
        # Fold the softmax scale into the Q columns of the qkv projection — free at
        # init, removes the per-KV-step q*scale VPU multiply and its bf16 rounding.
        w_qkv = w_qkv.at[:, :dim].multiply(self.scale)
        b_qkv = b_qkv.at[:dim].multiply(self.scale)
        self.w_qkv = w_qkv.astype(dtype)
        self.b_qkv = b_qkv.astype(dtype)
        self.w_proj = w_proj.astype(dtype)
        self.b_proj = b_proj.astype(dtype)
        # TODO(synk): use_rel_pos=True path (add_decomposed_rel_pos) not implemented —
        # module default is use_rel_pos=False.

    def __call__(self, x):
        B, H, W, C = x.shape
        S = H * W
        nH, hd = self.num_heads, self.head_dim
        x = x.astype(self.w_qkv.dtype)

        # qkv projection (weight-resident Pallas matmul, activations read once).
        qkv = linear(x.reshape(B * S, C), self.w_qkv, self.b_qkv)        # (B*S, 3C)

        # Head split: one fused HBM-round-trip transpose.
        # TODO(synk): this could be removed by reading strided per-head q/k/v slabs
        # straight out of the qkv buffer, but size-1 blocks on the second-minor
        # (head) axis are not portable across Mosaic versions and strided hd-wide
        # K/V DMA chunks would cut HBM efficiency on the *re-streamed* operands,
        # so the contiguous (B, nH, S, hd) layout is kept.
        qkv = qkv.reshape(B, S, 3, nH, hd).transpose(2, 0, 3, 1, 4)
        q, k, v = qkv[0], qkv[1], qkv[2]                                  # (B, nH, S, hd)

        # Flash attention; output already merged-head (B, S, C) -> no merge transpose.
        out = flash_attention(q, k, v)                                    # (B, S, C)

        # Output projection.
        out = linear(out.reshape(B * S, C), self.w_proj, self.b_proj)
        return out.reshape(B, H, W, C)


# ------------------------------ reference (JAX) ------------------------------

def reference_forward(mod: AttentionPallas, x):
    B, H, W, C = x.shape
    S = H * W
    nH, hd = mod.num_heads, mod.head_dim
    qkv = x.reshape(B * S, C).astype(jnp.float32) @ mod.w_qkv_raw + mod.b_qkv_raw
    qkv = qkv.reshape(B, S, 3, nH, hd).transpose(2, 0, 3, 1, 4).reshape(3, B * nH, S, hd)
    q, k, v = qkv[0], qkv[1], qkv[2]
    attn = (q * mod.scale) @ jnp.swapaxes(k, -2, -1)
    attn = jax.nn.softmax(attn, axis=-1)
    out = (attn @ v).reshape(B, nH, H, W, hd).transpose(0, 2, 3, 1, 4).reshape(B, H, W, C)
    out = out.reshape(B * S, C) @ mod.w_proj_raw + mod.b_proj_raw
    return out.reshape(B, H, W, C)


if __name__ == "__main__":
    key = jax.random.PRNGKey(0)
    kx, kp = jax.random.split(key)

    B, H, W, dim, num_heads = 2, 8, 8, 32, 4
    x = jax.random.normal(kx, (B, H, W, dim), jnp.float32)

    # f32 path — strict check against the JAX reference.
    mod = AttentionPallas(dim, num_heads=num_heads, key=kp)
    y = jax.block_until_ready(mod(x))
    y_ref = reference_forward(mod, x)
    assert y.shape == (B, H, W, dim)
    assert jnp.allclose(y, y_ref, atol=1e-4, rtol=1e-4), "f32 mismatch vs JAX reference"

    # bf16 MXU path: bf16 operands, f32 accumulation and f32 softmax math inside the
    # kernels. Loose tolerance vs the f32 reference.
    mod16 = AttentionPallas(dim, num_heads=num_heads, key=kp, dtype=jnp.bfloat16)
    y16 = jax.block_until_ready(mod16(x.astype(jnp.bfloat16)))
    assert y16.shape == (B, H, W, dim)
    assert jnp.allclose(y16.astype(jnp.float32), y_ref, atol=5e-2, rtol=5e-2), \
        "bf16 mismatch vs JAX reference"

    print("KERNEL_OK")
</pallas_src>

<mosaic_0001>
module attributes {stable_mosaic.version = 11 : i64} {
  func.func @linear_kernel(%arg0: i32, %arg1: i32, %arg2: memref<128x32xf32, #tpu.memory_space<vmem>>, %arg3: memref<32x96xf32, #tpu.memory_space<vmem>>, %arg4: memref<1x96xf32, #tpu.memory_space<vmem>>, %arg5: memref<128x96xf32, #tpu.memory_space<vmem>>) attributes {dimension_semantics = [#tpu.dimension_semantics<parallel>, #tpu.dimension_semantics<parallel>], iteration_bounds = array<i64: 1, 1>, scalar_prefetch = 0 : i64, scratch_operands = 0 : i64, tpu.core_type = #tpu.core_type<tc>, window_params = [{transform_indices = @transform_0, window_bounds = array<i64: 128, 32>}, {transform_indices = @transform_1, window_bounds = array<i64: 32, 96>}, {transform_indices = @transform_2, window_bounds = array<i64: 1, 96>}, {transform_indices = @transform_3, window_bounds = array<i64: 128, 96>}]} {
    %c0 = arith.constant 0 : index
    %c0_0 = arith.constant 0 : index
    %0 = vector.load %arg2[%c0, %c0_0] : memref<128x32xf32, #tpu.memory_space<vmem>>, vector<128x32xf32>
    %c0_1 = arith.constant 0 : index
    %c0_2 = arith.constant 0 : index
    %1 = vector.load %arg3[%c0_1, %c0_2] : memref<32x96xf32, #tpu.memory_space<vmem>>, vector<32x96xf32>
    %cst = arith.constant dense<0.000000e+00> : vector<128x96xf32>
    %2 = tpu.matmul %0, %1, %cst {dimension_numbers = #tpu.dot_dimension_numbers<[1], [0], [0], [1], [0, 0, 1, 1], [], []>} : vector<128x32xf32>, vector<32x96xf32>, vector<128x96xf32> -> vector<128x96xf32>
    %c0_3 = arith.constant 0 : index
    %c0_4 = arith.constant 0 : index
    %3 = vector.load %arg4[%c0_3, %c0_4] : memref<1x96xf32, #tpu.memory_space<vmem>>, vector<1x96xf32>
    %4 = vector.broadcast %3 : vector<1x96xf32> to vector<128x96xf32>
    %5 = arith.addf %2, %4 : vector<128x96xf32>
    %c0_5 = arith.constant 0 : index
    %c0_6 = arith.constant 0 : index
    %6 = vector.load %arg5[%c0_5, %c0_6] : memref<128x96xf32, #tpu.memory_space<vmem>>, vector<128x96xf32>
    tpu.vector_store %arg5[%c0_5, %c0_6], %5 {strides = array<i32>} : memref<128x96xf32, #tpu.memory_space<vmem>>, vector<128x96xf32>,
    return
  }
  func.func @transform_0(%arg0: i32, %arg1: i32) -> (i32, i32) {
    %c0_i32 = arith.constant 0 : i32
    %c0_i32_0 = arith.constant 0 : i32
    return %arg1, %c0_i32 : i32, i32
  }
  func.func @transform_1(%arg0: i32, %arg1: i32) -> (i32, i32) {
    %c0_i32 = arith.constant 0 : i32
    %c0_i32_0 = arith.constant 0 : i32
    return %c0_i32, %arg0 : i32, i32
  }
  func.func @transform_2(%arg0: i32, %arg1: i32) -> (i32, i32) {
    %c0_i32 = arith.constant 0 : i32
    %c0_i32_0 = arith.constant 0 : i32
    return %c0_i32, %arg0 : i32, i32
  }
  func.func @transform_3(%arg0: i32, %arg1: i32) -> (i32, i32) {
    %c0_i32 = arith.constant 0 : i32
    return %arg1, %arg0 : i32, i32
  }
}

</mosaic_0001>

<llo_original>
// kernel: tpu_custom_call.1
$region0: #{tpu_custom_call.1}
  #allocation0 [shape = 'u32[]', space=smem, size = 0x4, offset = 0x4, fixed_abs, tag = 'smem constant byte address 0x4 - core index']
  #allocation1 [shape = 'u32[72,128]{1,0:T(1,128)}', space=vmem, size = 0x9000, scoped, tag = 'internal scratch']
  %s0 = inlined_call_operand.vmem [shape: f32[128,32], index: 0, kind: input, shape index: {}]
  %s1 = inlined_call_operand.vmem [shape: f32[32,96], index: 1, kind: input, shape index: {}]
  %s2 = inlined_call_operand.vmem [shape: f32[1,96], index: 2, kind: input, shape index: {}]
  %s3 = inlined_call_operand.vmem [shape: f32[128,96], index: 3, kind: output, shape index: {}]
  %s4 = sld [smem:[#allocation0]]
  $region22: #{tpu_custom_call.1} parent=0
    _
  %s6 = ssub.s32 1, %s4
  %s7 = scalar_select 0, %s6, %s4
  // Predicated region
  $region2: #{tpu_custom_call.1} parent=0 // pred_check
    _
  $region3: #{tpu_custom_call.1} parent=0 // pred_check_branch
    %9 = sbr.rel (0) target = $region5
  $region4: #{tpu_custom_call.1} parent=0 // pred_region
    _
  $region5: #{tpu_custom_call.1} parent=0 // pred_fallthru
    _
  // Predicated region
  $region6: #{tpu_custom_call.1} parent=0 // pred_check
    _
  $region7: #{tpu_custom_call.1} parent=0 // pred_check_branch
    %11 = sbr.rel (0) target = $region9
  $region8: #{tpu_custom_call.1} parent=0 // pred_region
    _
  $region9: #{tpu_custom_call.1} parent=0 // pred_fallthru
    _
  // Predicated region
  $region10: #{tpu_custom_call.1} parent=0 // pred_check
    _
  $region11: #{tpu_custom_call.1} parent=0 // pred_check_branch
    %13 = sbr.rel (0) target = $region13
  $region12: #{tpu_custom_call.1} parent=0 // pred_region
    _
  $region13: #{tpu_custom_call.1} parent=0 // pred_fallthru
    _
  %v14 = vld [vmem:[%s0] sm:$0xff]
  %v15 = vld [vmem:[%s0 + $0x8] sm:$0xff]
  %v16 = vld [vmem:[%s0 + $0x10] sm:$0xff]
  %v17 = vld [vmem:[%s0 + $0x18] sm:$0xff]
  %v18 = vld [vmem:[%s0 + $0x20] sm:$0xff]
  %v19 = vld [vmem:[%s0 + $0x28] sm:$0xff]
  %v20 = vld [vmem:[%s0 + $0x30] sm:$0xff]
  %v21 = vld [vmem:[%s0 + $0x38] sm:$0xff]
  %v22 = vld [vmem:[%s0 + $0x40] sm:$0xff]
  %v23 = vld [vmem:[%s0 + $0x48] sm:$0xff]
  %v24 = vld [vmem:[%s0 + $0x50] sm:$0xff]
  %v25 = vld [vmem:[%s0 + $0x58] sm:$0xff]
  %v26 = vld [vmem:[%s0 + $0x60] sm:$0xff]
  %v27 = vld [vmem:[%s0 + $0x68] sm:$0xff]
  %v28 = vld [vmem:[%s0 + $0x70] sm:$0xff]
  %v29 = vld [vmem:[%s0 + $0x78] sm:$0xff]
  %v30 = vld [vmem:[%s1] sm:$0xff]
  %v31 = vld [vmem:[%s1 + $0x8] sm:$0xff]
  %v32 = vld [vmem:[%s1 + $0x10] sm:$0xff]
  %v33 = vld [vmem:[%s1 + $0x18] sm:$0xff]
  %v34 = vld [vmem:[%s2] sm:$0x1]
  %v36 = vperm.slane %v34, 0
  %vm38 = vcmask 261120
  %v40 = vsel %vm38, %v14, 0
  %v43 = vsel %vm38, %v15, 0
  %v46 = vsel %vm38, %v16, 0
  %v49 = vsel %vm38, %v17, 0
  %v52 = vsel %vm38, %v18, 0
  %v55 = vsel %vm38, %v19, 0
  %v58 = vsel %vm38, %v20, 0
  %v61 = vsel %vm38, %v21, 0
  %v64 = vsel %vm38, %v22, 0
  %v67 = vsel %vm38, %v23, 0
  %v70 = vsel %vm38, %v24, 0
  %v73 = vsel %vm38, %v25, 0
  %v76 = vsel %vm38, %v26, 0
  %v79 = vsel %vm38, %v27, 0
  %v82 = vsel %vm38, %v28, 0
  %v85 = vsel %vm38, %v29, 0
  %87 = vmatpush.msra.mxu0 0.0
  %88 = vmatpush.msra.mxu0 0.0
  %89 = vmatpush.msra.mxu0 0.0
  %90 = vmatpush.msra.mxu0 0.0
  %91 = vmatpush.msra.mxu0 0.0
  %92 = vmatpush.msra.mxu0 0.0
  %93 = vmatpush.msra.mxu0 0.0
  %94 = vmatpush.msra.mxu0 0.0
  %95 = vmatpush.msra.mxu0 0.0
  %96 = vmatpush.msra.mxu0 0.0
  %97 = vmatpush.msra.mxu0 0.0
  %98 = vmatpush.msra.mxu0 0.0
  %99 = vmatpush.msra.mxu0 %v33
  %100 = vmatpush.msra.mxu0 %v32
  %101 = vmatpush.msra.mxu0 %v31
  %102 = vmatpush.msra.mxu0 %v30
  %103 = vmatmul.f32.gmra.mxu0 %v40
  %v104 = vpop.f32.mrf.mxu0
  %v105 = vadd.f32 %v36, %v104
  %106 = vmatmul.f32.gmra.mxu0 %v43
  %v107 = vpop.f32.mrf.mxu0
  %v108 = vadd.f32 %v36, %v107
  %109 = vmatmul.f32.gmra.mxu0 %v46
  %v110 = vpop.f32.mrf.mxu0
  %v111 = vadd.f32 %v36, %v110
  %112 = vmatmul.f32.gmra.mxu0 %v49
  %v113 = vpop.f32.mrf.mxu0
  %v114 = vadd.f32 %v36, %v113
  %115 = vmatmul.f32.gmra.mxu0 %v52
  %v116 = vpop.f32.mrf.mxu0
  %v117 = vadd.f32 %v36, %v116
  %118 = vmatmul.f32.gmra.mxu0 %v55
  %v119 = vpop.f32.mrf.mxu0
  %v120 = vadd.f32 %v36, %v119
  %121 = vmatmul.f32.gmra.mxu0 %v58
  %v122 = vpop.f32.mrf.mxu0
  %v123 = vadd.f32 %v36, %v122
  %124 = vmatmul.f32.gmra.mxu0 %v61
  %v125 = vpop.f32.mrf.mxu0
  %v126 = vadd.f32 %v36, %v125
  %127 = vmatmul.f32.gmra.mxu0 %v64
  %v128 = vpop.f32.mrf.mxu0
  %v129 = vadd.f32 %v36, %v128
  %130 = vmatmul.f32.gmra.mxu0 %v67
  %v131 = vpop.f32.mrf.mxu0
  %v132 = vadd.f32 %v36, %v131
  %133 = vmatmul.f32.gmra.mxu0 %v70
  %v134 = vpop.f32.mrf.mxu0
  %v135 = vadd.f32 %v36, %v134
  %136 = vmatmul.f32.gmra.mxu0 %v73
  %v137 = vpop.f32.mrf.mxu0
  %v138 = vadd.f32 %v36, %v137
  %139 = vmatmul.f32.gmra.mxu0 %v76
  %v140 = vpop.f32.mrf.mxu0
  %v141 = vadd.f32 %v36, %v140
  %142 = vmatmul.f32.gmra.mxu0 %v79
  %v143 = vpop.f32.mrf.mxu0
  %v144 = vadd.f32 %v36, %v143
  %145 = vmatmul.f32.gmra.mxu0 %v82
  %v146 = vpop.f32.mrf.mxu0
  %v147 = vadd.f32 %v36, %v146
  %148 = vmatmul.f32.gmra.mxu0 %v85
  %v149 = vpop.f32.mrf.mxu0
  %v150 = vadd.f32 %v36, %v149
  %151 = vdwg.mxu0
  %vm152 = vcmask 785408
  %153 = vst.msk [vmem:[%s3] sm:$0xff] %vm152, %v105
  %154 = vst.msk [vmem:[%s3 + $0x8] sm:$0xff] %vm152, %v108
  %155 = vst.msk [vmem:[%s3 + $0x10] sm:$0xff] %vm152, %v111
  %156 = vst.msk [vmem:[%s3 + $0x18] sm:$0xff] %vm152, %v114
  %157 = vst.msk [vmem:[%s3 + $0x20] sm:$0xff] %vm152, %v117
  %158 = vst.msk [vmem:[%s3 + $0x28] sm:$0xff] %vm152, %v120
  %159 = vst.msk [vmem:[%s3 + $0x30] sm:$0xff] %vm152, %v123
  %160 = vst.msk [vmem:[%s3 + $0x38] sm:$0xff] %vm152, %v126
  %161 = vst.msk [vmem:[%s3 + $0x40] sm:$0xff] %vm152, %v129
  %162 = vst.msk [vmem:[%s3 + $0x48] sm:$0xff] %vm152, %v132
  %163 = vst.msk [vmem:[%s3 + $0x50] sm:$0xff] %vm152, %v135
  %164 = vst.msk [vmem:[%s3 + $0x58] sm:$0xff] %vm152, %v138
  %165 = vst.msk [vmem:[%s3 + $0x60] sm:$0xff] %vm152, %v141
  %166 = vst.msk [vmem:[%s3 + $0x68] sm:$0xff] %vm152, %v144
  %167 = vst.msk [vmem:[%s3 + $0x70] sm:$0xff] %vm152, %v147
  %168 = vst.msk [vmem:[%s3 + $0x78] sm:$0xff] %vm152, %v150
  // Predicated region
  $region14: #{tpu_custom_call.1} parent=0 // pred_check
    _
  $region15: #{tpu_custom_call.1} parent=0 // pred_check_branch
    %170 = sbr.rel (0) target = $region17
  $region16: #{tpu_custom_call.1} parent=0 // pred_region
    _
  $region17: #{tpu_custom_call.1} parent=0 // pred_fallthru
    _
  // Predicated region
  $region18: #{tpu_custom_call.1} parent=0 // pred_check
    _
  $region19: #{tpu_custom_call.1} parent=0 // pred_check_branch
    %172 = sbr.rel (0) target = $region21
  $region20: #{tpu_custom_call.1} parent=0 // pred_region
    _
  $region21: #{tpu_custom_call.1} parent=0 // pred_fallthru
    _

</llo_original>
